<compile_context>
chip_gen: v7x
topology: tpu7x:2x2x1
jax: 0.10.0
libtpu: 0.0.40
codegen_flags: <defaults>
</compile_context>

<pallas_src>
import jax
import jax.numpy as jnp
from jax.experimental import pallas as pl
from jax.experimental.pallas import tpu as pltpu


LANE = 128  # TPU lane width; feature axes are padded to a multiple of it.


def _round_up(n, m):
    return ((n + m - 1) // m) * m


def _full_spec(shape):
    # Single-block spec (grid=()): block == full array, satisfies the (8,128)
    # rule for any shape.
    return pl.BlockSpec(shape, lambda: (0,) * len(shape))


def _pad2d(a, rows, cols):
    r, c = a.shape
    return jnp.pad(a, ((0, rows - r), (0, cols - c)))


# ---------------------------------------------------------------------------
# Fused backbone + head kernel (built for a static group layout)
# ---------------------------------------------------------------------------
def _make_kernel(n_groups, group_rows, row_offsets, inv_hw):
    """group_rows[g]  -> batched rows of resolution group g (B * crops_in_group).
    row_offsets[g]    -> first output row of group g.
    inv_hw[g]         -> 1 / (H*W) for group g (pool normalization)."""

    def kernel(*refs):
        x_refs = refs[:n_groups]                                  # (Bg, C, HW) bf16
        wb_ref, bb_ref, w1_ref, b1_ref, w2_ref, b2_ref = refs[n_groups:n_groups + 6]
        o_ref = refs[n_groups + 6]                                # (N_total, Kp) f32

        # Parameter loads hoisted out of the per-group loop (no re-load /
        # re-broadcast per group; JAX does not CSE broadcast_in_dim).
        wb = wb_ref[...]      # (C,  Dp) f32
        bb = bb_ref[...]      # (1,  Dp) f32
        w1 = w1_ref[...]      # (Dp, Hp) bf16
        b1 = b1_ref[...]      # (1,  Hp) f32
        w2 = w2_ref[...]      # (Hp, Kp) bf16
        b2 = b2_ref[...]      # (1,  Kp) f32

        for g in range(n_groups):
            # ---- backbone: global average pool + projection (group-batched) ----
            xg = x_refs[g][...].astype(jnp.float32)               # (Bg, C, HW)
            pooled = jnp.sum(xg, axis=-1) * inv_hw[g]             # (Bg, C) f32
            feat = jnp.dot(pooled, wb,
                           preferred_element_type=jnp.float32) + bb   # (Bg, Dp)

            # ---- head MLP (features never leave vregs) --------------------------
            h = jnp.dot(feat.astype(jnp.bfloat16), w1,
                        preferred_element_type=jnp.float32) + b1
            # TODO(synk): PyTorch nn.GELU defaults to exact erf; using the tanh
            # approximation here (EUP-friendly, matched by the reference below).
            h = jax.nn.gelu(h)
            og = jnp.dot(h.astype(jnp.bfloat16), w2,
                         preferred_element_type=jnp.float32) + b2

            r0 = row_offsets[g]
            o_ref[r0:r0 + group_rows[g], :] = og.astype(o_ref.dtype)

    return kernel


# ---------------------------------------------------------------------------
# MultiCropWrapper forward (matches the PyTorch semantics)
# ---------------------------------------------------------------------------
def multi_crop_forward(x, params):
    """x: single array (N,C,H,W) or a list of arrays with possibly different H,W."""
    if not isinstance(x, (list, tuple)):
        x = [x]

    # torch.cumsum(torch.unique_consecutive([inp.shape[-1]], return_counts=True)[1])
    # -> group consecutive crops with the same last spatial dim (static shapes,
    # so plain Python).
    groups = []  # list of [last_dim, [crop indices]]
    for i, inp in enumerate(x):
        last = int(inp.shape[-1])
        if groups and groups[-1][0] == last:
            groups[-1][1].append(i)
        else:
            groups.append([last, [i]])

    w_b = params["w_backbone"].astype(jnp.float32)
    b_b = params["b_backbone"].astype(jnp.float32)
    w1, b1 = params["w1"], params["b1"]
    w2, b2 = params["w2"], params["b2"]
    C = int(x[0].shape[1])
    D, HID, OUT = int(w_b.shape[1]), int(w1.shape[1]), int(w2.shape[1])
    Dp, Hp, Kp = _round_up(D, LANE), _round_up(HID, LANE), _round_up(OUT, LANE)

    # One batched slab per resolution group (mirrors torch.cat in the module),
    # flattened spatially and cast to bf16 (halves pixel DMA bytes, 2x MXU rate;
    # accumulation stays f32 inside the kernel).
    x_groups, group_rows, row_offsets, inv_hw, acc = [], [], [], [], 0
    for _, idxs in groups:
        slab = (jnp.concatenate([x[i] for i in idxs], axis=0)
                if len(idxs) > 1 else x[idxs[0]])
        Bg = int(slab.shape[0])
        hw = int(slab.shape[-2]) * int(slab.shape[-1])
        x_groups.append(slab.reshape(Bg, C, hw).astype(jnp.bfloat16))
        group_rows.append(Bg)
        row_offsets.append(acc)
        inv_hw.append(1.0 / float(hw))
        acc += Bg
    n_total = acc

    # Lane-padded parameters (zero padding is numerically exact: padded feature
    # / hidden lanes stay zero through bias-add and GELU(0)=0).
    wbp = _pad2d(w_b, C, Dp)                               # f32  (tiny)
    bbp = _pad2d(b_b, 1, Dp)                               # f32
    w1p = _pad2d(w1, Dp, Hp).astype(jnp.bfloat16)
    b1p = _pad2d(b1, 1, Hp).astype(jnp.float32)
    w2p = _pad2d(w2, Hp, Kp).astype(jnp.bfloat16)
    b2p = _pad2d(b2, 1, Kp).astype(jnp.float32)

    in_specs = ([_full_spec(xg.shape) for xg in x_groups]
                + [_full_spec(a.shape) for a in (wbp, bbp, w1p, b1p, w2p, b2p)])

    kernel = _make_kernel(len(groups), tuple(group_rows), tuple(row_offsets),
                          tuple(inv_hw))

    # TODO(synk): at realistic DINO sizes (C=3, 224x224, B>=32) add a row grid
    # marked "parallel" (2 TensorCores on v7x) plus a trailing "arbitrary"
    # K=C*HW reduction axis with a VMEM f32 accumulator and pl.when init/finalize,
    # re-deriving tiles against v7x's 64 MiB VMEM.  At these toy sizes a single
    # VMEM-resident block is fastest (per-step pipeline overhead ~0.35 us).
    out_padded = pl.pallas_call(
        kernel,
        out_shape=jax.ShapeDtypeStruct((n_total, Kp), jnp.float32),
        grid=(),
        in_specs=in_specs,
        out_specs=_full_spec((n_total, Kp)),
        compiler_params=pltpu.CompilerParams(
            vmem_limit_bytes=32 * 1024 * 1024),
    )(*x_groups, wbp, bbp, w1p, b1p, w2p, b2p)

    return out_padded[:, :OUT]


# ---------------------------------------------------------------------------
# Main
# ---------------------------------------------------------------------------
if __name__ == "__main__":
    key = jax.random.PRNGKey(0)
    kx1, kx2, kw, kb, kw1, kb1, kw2, kb2 = jax.random.split(key, 8)

    B, C = 2, 4          # batch per crop, channels
    D = 32               # backbone feature dim
    HIDDEN = 32          # head hidden dim
    OUT = 64             # head output dim

    # 2 global crops at 16x16, 4 local crops at 8x8 (consecutive same-res groups)
    globals_ = [jax.random.normal(jax.random.fold_in(kx1, i), (B, C, 16, 16),
                                  dtype=jnp.float32) for i in range(2)]
    locals_ = [jax.random.normal(jax.random.fold_in(kx2, i), (B, C, 8, 8),
                                 dtype=jnp.float32) for i in range(4)]
    crops = globals_ + locals_

    params = {
        "w_backbone": jax.random.normal(kw, (C, D), dtype=jnp.float32) * 0.1,
        "b_backbone": jax.random.normal(kb, (1, D), dtype=jnp.float32) * 0.01,
        "w1": jax.random.normal(kw1, (D, HIDDEN), dtype=jnp.float32) * 0.1,
        "b1": jax.random.normal(kb1, (1, HIDDEN), dtype=jnp.float32) * 0.01,
        "w2": jax.random.normal(kw2, (HIDDEN, OUT), dtype=jnp.float32) * 0.1,
        "b2": jax.random.normal(kb2, (1, OUT), dtype=jnp.float32) * 0.01,
    }

    out = multi_crop_forward(crops, params)
    out = jax.block_until_ready(out)

    # Reference in plain f32 JAX (pool -> proj -> MLP head, same GELU approx).
    def ref_forward(crops, p):
        feats = []
        for c in crops:
            pooled = jnp.mean(c.reshape(c.shape[0], c.shape[1], -1), axis=-1)
            feats.append(pooled @ p["w_backbone"] + p["b_backbone"])
        f = jnp.concatenate(feats, axis=0)
        h = jax.nn.gelu(f @ p["w1"] + p["b1"])
        return h @ p["w2"] + p["b2"]

    ref = ref_forward(crops, params)
    assert out.shape == (len(crops) * B, OUT), out.shape
    max_err = float(jnp.max(jnp.abs(out - ref)))
    # Tolerance covers the bf16 cast of pixels / head matmul operands
    # (accumulation is f32 in both kernel and reference).
    assert jnp.allclose(out, ref, atol=2e-3, rtol=2e-3), max_err

    print("KERNEL_OK")
</pallas_src>

<mosaic_0001>
module attributes {stable_mosaic.version = 11 : i64} {
  func.func @kernel(%arg0: memref<4x4x256xbf16, #tpu.memory_space<vmem>>, %arg1: memref<8x4x64xbf16, #tpu.memory_space<vmem>>, %arg2: memref<4x128xf32, #tpu.memory_space<vmem>>, %arg3: memref<1x128xf32, #tpu.memory_space<vmem>>, %arg4: memref<128x128xbf16, #tpu.memory_space<vmem>>, %arg5: memref<1x128xf32, #tpu.memory_space<vmem>>, %arg6: memref<128x128xbf16, #tpu.memory_space<vmem>>, %arg7: memref<1x128xf32, #tpu.memory_space<vmem>>, %arg8: memref<12x128xf32, #tpu.memory_space<vmem>>) attributes {dimension_semantics = [], scalar_prefetch = 0 : i64, scratch_operands = 0 : i64, tpu.core_type = #tpu.core_type<tc>} {
    %c0 = arith.constant 0 : index
    %c0_0 = arith.constant 0 : index
    %0 = vector.load %arg2[%c0, %c0_0] : memref<4x128xf32, #tpu.memory_space<vmem>>, vector<4x128xf32>
    %c0_1 = arith.constant 0 : index
    %c0_2 = arith.constant 0 : index
    %1 = vector.load %arg3[%c0_1, %c0_2] : memref<1x128xf32, #tpu.memory_space<vmem>>, vector<1x128xf32>
    %c0_3 = arith.constant 0 : index
    %c0_4 = arith.constant 0 : index
    %2 = vector.load %arg4[%c0_3, %c0_4] : memref<128x128xbf16, #tpu.memory_space<vmem>>, vector<128x128xbf16>
    %c0_5 = arith.constant 0 : index
    %c0_6 = arith.constant 0 : index
    %3 = vector.load %arg5[%c0_5, %c0_6] : memref<1x128xf32, #tpu.memory_space<vmem>>, vector<1x128xf32>
    %c0_7 = arith.constant 0 : index
    %c0_8 = arith.constant 0 : index
    %4 = vector.load %arg6[%c0_7, %c0_8] : memref<128x128xbf16, #tpu.memory_space<vmem>>, vector<128x128xbf16>
    %c0_9 = arith.constant 0 : index
    %c0_10 = arith.constant 0 : index
    %5 = vector.load %arg7[%c0_9, %c0_10] : memref<1x128xf32, #tpu.memory_space<vmem>>, vector<1x128xf32>
    %c0_11 = arith.constant 0 : index
    %c0_12 = arith.constant 0 : index
    %c0_13 = arith.constant 0 : index
    %6 = vector.load %arg0[%c0_11, %c0_12, %c0_13] : memref<4x4x256xbf16, #tpu.memory_space<vmem>>, vector<4x4x256xbf16>
    %7 = arith.extf %6 : vector<4x4x256xbf16> to vector<4x4x256xf32>
    %cst = arith.constant dense<0.000000e+00> : vector<4x4xf32>
    %8 = vector.multi_reduction <add>, %7, %cst [2] : vector<4x4x256xf32> to vector<4x4xf32>
    %cst_14 = arith.constant 3.906250e-03 : f32
    %9 = vector.broadcast %cst_14 : f32 to vector<4x4xf32>
    %10 = arith.mulf %8, %9 : vector<4x4xf32>
    %cst_15 = arith.constant dense<0.000000e+00> : vector<4x128xf32>
    %11 = tpu.matmul %10, %0, %cst_15 {dimension_numbers = #tpu.dot_dimension_numbers<[1], [0], [0], [1], [0, 0, 1, 1], [], []>} : vector<4x4xf32>, vector<4x128xf32>, vector<4x128xf32> -> vector<4x128xf32>
    %12 = vector.broadcast %1 : vector<1x128xf32> to vector<4x128xf32>
    %13 = arith.addf %11, %12 : vector<4x128xf32>
    %14 = arith.truncf %13 : vector<4x128xf32> to vector<4x128xbf16>
    %cst_16 = arith.constant dense<0.000000e+00> : vector<4x128xf32>
    %15 = tpu.matmul %14, %2, %cst_16 {dimension_numbers = #tpu.dot_dimension_numbers<[1], [0], [0], [1], [0, 0, 1, 1], [], []>} : vector<4x128xbf16>, vector<128x128xbf16>, vector<4x128xf32> -> vector<4x128xf32>
    %16 = vector.broadcast %3 : vector<1x128xf32> to vector<4x128xf32>
    %17 = arith.addf %15, %16 : vector<4x128xf32>
    %18 = arith.mulf %17, %17 : vector<4x128xf32>
    %19 = arith.mulf %17, %18 : vector<4x128xf32>
    %cst_17 = arith.constant 4.471500e-02 : f32
    %20 = vector.broadcast %cst_17 : f32 to vector<4x128xf32>
    %21 = arith.mulf %20, %19 : vector<4x128xf32>
    %22 = arith.addf %17, %21 : vector<4x128xf32>
    %cst_18 = arith.constant 0.797884583 : f32
    %23 = vector.broadcast %cst_18 : f32 to vector<4x128xf32>
    %24 = arith.mulf %23, %22 : vector<4x128xf32>
    %25 = math.tanh %24 : vector<4x128xf32>
    %cst_19 = arith.constant 1.000000e+00 : f32
    %26 = vector.broadcast %cst_19 : f32 to vector<4x128xf32>
    %27 = arith.addf %26, %25 : vector<4x128xf32>
    %cst_20 = arith.constant 5.000000e-01 : f32
    %28 = vector.broadcast %cst_20 : f32 to vector<4x128xf32>
    %29 = arith.mulf %28, %27 : vector<4x128xf32>
    %30 = arith.mulf %17, %29 : vector<4x128xf32>
    %31 = arith.truncf %30 : vector<4x128xf32> to vector<4x128xbf16>
    %cst_21 = arith.constant dense<0.000000e+00> : vector<4x128xf32>
    %32 = tpu.matmul %31, %4, %cst_21 {dimension_numbers = #tpu.dot_dimension_numbers<[1], [0], [0], [1], [0, 0, 1, 1], [], []>} : vector<4x128xbf16>, vector<128x128xbf16>, vector<4x128xf32> -> vector<4x128xf32>
    %33 = vector.broadcast %5 : vector<1x128xf32> to vector<4x128xf32>
    %34 = arith.addf %32, %33 : vector<4x128xf32>
    %c0_22 = arith.constant 0 : index
    %c0_23 = arith.constant 0 : index
    %35 = vector.load %arg8[%c0_22, %c0_23] : memref<12x128xf32, #tpu.memory_space<vmem>>, vector<4x128xf32>
    tpu.vector_store %arg8[%c0_22, %c0_23], %34 {strides = array<i32>} : memref<12x128xf32, #tpu.memory_space<vmem>>, vector<4x128xf32>,
    %c0_24 = arith.constant 0 : index
    %c0_25 = arith.constant 0 : index
    %c0_26 = arith.constant 0 : index
    %36 = vector.load %arg1[%c0_24, %c0_25, %c0_26] : memref<8x4x64xbf16, #tpu.memory_space<vmem>>, vector<8x4x64xbf16>
    %37 = arith.extf %36 : vector<8x4x64xbf16> to vector<8x4x64xf32>
    %cst_27 = arith.constant dense<0.000000e+00> : vector<8x4xf32>
    %38 = vector.multi_reduction <add>, %37, %cst_27 [2] : vector<8x4x64xf32> to vector<8x4xf32>
    %cst_28 = arith.constant 1.562500e-02 : f32
    %39 = vector.broadcast %cst_28 : f32 to vector<8x4xf32>
    %40 = arith.mulf %38, %39 : vector<8x4xf32>
    %cst_29 = arith.constant dense<0.000000e+00> : vector<8x128xf32>
    %41 = tpu.matmul %40, %0, %cst_29 {dimension_numbers = #tpu.dot_dimension_numbers<[1], [0], [0], [1], [0, 0, 1, 1], [], []>} : vector<8x4xf32>, vector<4x128xf32>, vector<8x128xf32> -> vector<8x128xf32>
    %42 = vector.broadcast %1 : vector<1x128xf32> to vector<8x128xf32>
    %43 = arith.addf %41, %42 : vector<8x128xf32>
    %44 = arith.truncf %43 : vector<8x128xf32> to vector<8x128xbf16>
    %cst_30 = arith.constant dense<0.000000e+00> : vector<8x128xf32>
    %45 = tpu.matmul %44, %2, %cst_30 {dimension_numbers = #tpu.dot_dimension_numbers<[1], [0], [0], [1], [0, 0, 1, 1], [], []>} : vector<8x128xbf16>, vector<128x128xbf16>, vector<8x128xf32> -> vector<8x128xf32>
    %46 = vector.broadcast %3 : vector<1x128xf32> to vector<8x128xf32>
    %47 = arith.addf %45, %46 : vector<8x128xf32>
    %48 = arith.mulf %47, %47 : vector<8x128xf32>
    %49 = arith.mulf %47, %48 : vector<8x128xf32>
    %cst_31 = arith.constant 4.471500e-02 : f32
    %50 = vector.broadcast %cst_31 : f32 to vector<8x128xf32>
    %51 = arith.mulf %50, %49 : vector<8x128xf32>
    %52 = arith.addf %47, %51 : vector<8x128xf32>
    %cst_32 = arith.constant 0.797884583 : f32
    %53 = vector.broadcast %cst_32 : f32 to vector<8x128xf32>
    %54 = arith.mulf %53, %52 : vector<8x128xf32>
    %55 = math.tanh %54 : vector<8x128xf32>
    %cst_33 = arith.constant 1.000000e+00 : f32
    %56 = vector.broadcast %cst_33 : f32 to vector<8x128xf32>
    %57 = arith.addf %56, %55 : vector<8x128xf32>
    %cst_34 = arith.constant 5.000000e-01 : f32
    %58 = vector.broadcast %cst_34 : f32 to vector<8x128xf32>
    %59 = arith.mulf %58, %57 : vector<8x128xf32>
    %60 = arith.mulf %47, %59 : vector<8x128xf32>
    %61 = arith.truncf %60 : vector<8x128xf32> to vector<8x128xbf16>
    %cst_35 = arith.constant dense<0.000000e+00> : vector<8x128xf32>
    %62 = tpu.matmul %61, %4, %cst_35 {dimension_numbers = #tpu.dot_dimension_numbers<[1], [0], [0], [1], [0, 0, 1, 1], [], []>} : vector<8x128xbf16>, vector<128x128xbf16>, vector<8x128xf32> -> vector<8x128xf32>
    %63 = vector.broadcast %5 : vector<1x128xf32> to vector<8x128xf32>
    %64 = arith.addf %62, %63 : vector<8x128xf32>
    %c4 = arith.constant 4 : index
    %c0_36 = arith.constant 0 : index
    %65 = vector.load %arg8[%c4, %c0_36] : memref<12x128xf32, #tpu.memory_space<vmem>>, vector<8x128xf32>
    tpu.vector_store %arg8[%c4, %c0_36], %64 {strides = array<i32>} : memref<12x128xf32, #tpu.memory_space<vmem>>, vector<8x128xf32>,
    return
  }
}

</mosaic_0001>

<llo_original>
// kernel: tpu_custom_call.1
$region0: #{tpu_custom_call.1}
  #allocation0 [shape = 'u32[]', space=smem, size = 0x4, offset = 0x4, fixed_abs, tag = 'smem constant byte address 0x4 - core index']
  #allocation1 [shape = 'u32[144,128]{1,0:T(1,128)}', space=vmem, size = 0x12000, scoped, tag = 'internal scratch']
  %s0 = inlined_call_operand.hbm [shape: bf16[4,4,256], index: 0, kind: input, shape index: {}]
  %s1 = inlined_call_operand.hbm [shape: bf16[8,4,64], index: 1, kind: input, shape index: {}]
  %s2 = inlined_call_operand.vmem [shape: f32[4,128], index: 2, kind: input, shape index: {}]
  %s3 = inlined_call_operand.vmem [shape: f32[1,128], index: 3, kind: input, shape index: {}]
  %s4 = inlined_call_operand.hbm [shape: bf16[128,128], index: 4, kind: input, shape index: {}]
  %s5 = inlined_call_operand.vmem [shape: f32[1,128], index: 5, kind: input, shape index: {}]
  %s6 = inlined_call_operand.hbm [shape: bf16[128,128], index: 6, kind: input, shape index: {}]
  %s7 = inlined_call_operand.vmem [shape: f32[1,128], index: 7, kind: input, shape index: {}]
  %s8 = inlined_call_operand.hbm [shape: f32[12,128], index: 8, kind: output, shape index: {}]
  %s9 = sld [smem:[#allocation0]]
  $region58: #{tpu_custom_call.1} parent=0
    _
  %s11 = ssub.s32 1, %s9
  %s12 = scalar_select 0, %s11, %s9
  $region1: #{tpu_custom_call.1} parent=0
    #allocation2 [shape = 'u8[8192]{0}', space=vmem, size = 0x2000, scoped, tag = 'input window, operand 0, single buffered']
    #allocation3 [shape = 's32[1]{0}', space=sflag, size = 0x4, scoped, tag = 'scoped memory for tpu_custom_call.1']
    #allocation4 [shape = 's32[1]{0}', space=sflag, size = 0x4, scoped, tag = 'scoped memory for tpu_custom_call.1']
    #allocation5 [shape = 'u8[8192]{0}', space=vmem, size = 0x2000, scoped, tag = 'input window, operand 1, single buffered']
    #allocation6 [shape = 's32[1]{0}', space=sflag, size = 0x4, scoped, tag = 'scoped memory for tpu_custom_call.1']
    #allocation7 [shape = 'u8[32768]{0}', space=vmem, size = 0x8000, scoped, tag = 'input window, operand 4, single buffered']
    #allocation8 [shape = 'u8[32768]{0}', space=vmem, size = 0x8000, scoped, tag = 'input window, operand 6, single buffered']
    #allocation9 [shape = 's32[1]{0}', space=sflag, size = 0x4, scoped, tag = 'scoped memory for tpu_custom_call.1']
    #allocation10 [shape = 'u8[8192]{0}', space=vmem, size = 0x2000, scoped, tag = 'output window, operand 0, single buffered']
    %13 = vsyncpa [#allocation3], 0
    %14 = vsyncpa [#allocation6], 0
    %15 = vsyncpa [#allocation9], 0
    %16 = vsyncpa [#allocation4], 0
    // Predicated region
    $region2: #{tpu_custom_call.1} parent=1 // pred_check
      _
    $region3: #{tpu_custom_call.1} parent=1 // pred_check_branch
      %18 = sbr.rel (0) target = $region5
    $region4: #{tpu_custom_call.1} parent=1 // pred_region
      %s20 = ssub.s32 256, 256
      %21 = vsyncadd [#allocation3], %s20
      %s22 = sshll.u32 [#allocation2], 4
      %s23 = int_to_ptr.vmem [resolvable:$true] %s22
      %28 = dma.hbm_to_vmem [thread:$0]  %s0, 256, %s23, [#allocation3], 64, 64, 4
    $region5: #{tpu_custom_call.1} parent=1 // pred_fallthru
      _
    // Predicated region
    $region6: #{tpu_custom_call.1} parent=1 // pred_check
      _
    $region7: #{tpu_custom_call.1} parent=1 // pred_check_branch
      %30 = sbr.rel (0) target = $region9
    $region8: #{tpu_custom_call.1} parent=1 // pred_region
      %s32 = ssub.s32 256, 256
      %33 = vsyncadd [#allocation6], %s32
      %s34 = sshll.u32 [#allocation5], 4
      %s35 = int_to_ptr.vmem [resolvable:$true] %s34
      %40 = dma.hbm_to_vmem [thread:$0]  %s1, 256, %s35, [#allocation6], 32, 32, 2
    $region9: #{tpu_custom_call.1} parent=1 // pred_fallthru
      _
    // Predicated region
    $region10: #{tpu_custom_call.1} parent=1 // pred_check
      _
    $region11: #{tpu_custom_call.1} parent=1 // pred_check_branch
      %42 = sbr.rel (0) target = $region13
    $region12: #{tpu_custom_call.1} parent=1 // pred_region
      _
    $region13: #{tpu_custom_call.1} parent=1 // pred_fallthru
      _
    // Predicated region
    $region14: #{tpu_custom_call.1} parent=1 // pred_check
      _
    $region15: #{tpu_custom_call.1} parent=1 // pred_check_branch
      %44 = sbr.rel (0) target = $region17
    $region16: #{tpu_custom_call.1} parent=1 // pred_region
      _
    $region17: #{tpu_custom_call.1} parent=1 // pred_fallthru
      _
    // Predicated region
    $region18: #{tpu_custom_call.1} parent=1 // pred_check
      _
    $region19: #{tpu_custom_call.1} parent=1 // pred_check_branch
      %46 = sbr.rel (0) target = $region21
    $region20: #{tpu_custom_call.1} parent=1 // pred_region
      %s48 = ssub.s32 1024, 1024
      %49 = vsyncadd [#allocation6], %s48
      %s50 = sshll.u32 [#allocation7], 4
      %s51 = int_to_ptr.vmem [resolvable:$true] %s50
      %56 = dma.hbm_to_vmem [thread:$0]  %s4, 1024, %s51, [#allocation6], 64, 64, 4
    $region21: #{tpu_custom_call.1} parent=1 // pred_fallthru
      _
    // Predicated region
    $region22: #{tpu_custom_call.1} parent=1 // pred_check
      _
    $region23: #{tpu_custom_call.1} parent=1 // pred_check_branch
      %58 = sbr.rel (0) target = $region25
    $region24: #{tpu_custom_call.1} parent=1 // pred_region
      _
    $region25: #{tpu_custom_call.1} parent=1 // pred_fallthru
      _
    // Predicated region
    $region26: #{tpu_custom_call.1} parent=1 // pred_check
      _
    $region27: #{tpu_custom_call.1} parent=1 // pred_check_branch
      %60 = sbr.rel (0) target = $region29
    $region28: #{tpu_custom_call.1} parent=1 // pred_region
      %s62 = ssub.s32 1024, 1024
      %63 = vsyncadd [#allocation9], %s62
      %s64 = sshll.u32 [#allocation8], 4
      %s65 = int_to_ptr.vmem [resolvable:$true] %s64
      %70 = dma.hbm_to_vmem [thread:$0]  %s6, 1024, %s65, [#allocation9], 64, 64, 4
    $region29: #{tpu_custom_call.1} parent=1 // pred_fallthru
      _
    // Predicated region
    $region30: #{tpu_custom_call.1} parent=1 // pred_check
      _
    $region31: #{tpu_custom_call.1} parent=1 // pred_check_branch
      %72 = sbr.rel (0) target = $region33
    $region32: #{tpu_custom_call.1} parent=1 // pred_region
      _
    $region33: #{tpu_custom_call.1} parent=1 // pred_fallthru
      _
    // Predicated region
    $region34: #{tpu_custom_call.1} parent=1 // pred_check
      _
    $region35: #{tpu_custom_call.1} parent=1 // pred_check_branch
      %74 = sbr.rel (0) target = $region37
    $region36: #{tpu_custom_call.1} parent=1 // pred_region
      %75 = dma.done [#allocation3], 256
    $region37: #{tpu_custom_call.1} parent=1 // pred_fallthru
      _
    // Predicated region
    $region38: #{tpu_custom_call.1} parent=1 // pred_check
      _
    $region39: #{tpu_custom_call.1} parent=1 // pred_check_branch
      %77 = sbr.rel (0) target = $region41
    $region40: #{tpu_custom_call.1} parent=1 // pred_region
      %78 = dma.done [#allocation6], 256
    $region41: #{tpu_custom_call.1} parent=1 // pred_fallthru
      _
    // Predicated region
    $region42: #{tpu_custom_call.1} parent=1 // pred_check
      _
    $region43: #{tpu_custom_call.1} parent=1 // pred_check_branch
      %80 = sbr.rel (0) target = $region45
    $region44: #{tpu_custom_call.1} parent=1 // pred_region
      %81 = dma.done [#allocation6], 1024
    $region45: #{tpu_custom_call.1} parent=1 // pred_fallthru
      _
    // Predicated region
    $region46: #{tpu_custom_call.1} parent=1 // pred_check
      _
    $region47: #{tpu_custom_call.1} parent=1 // pred_check_branch
      %83 = sbr.rel (0) target = $region49
    $region48: #{tpu_custom_call.1} parent=1 // pred_region
      %84 = dma.done [#allocation9], 1024
    $region49: #{tpu_custom_call.1} parent=1 // pred_fallthru
      _
    %v86 = vld [vmem:[%s2] sm:$0xf]
    %v87 = vld [vmem:[%s3] sm:$0x1]
    %v88 = vld [vmem:[#allocation7] sm:$0xf]
    %v89 = vld [vmem:[#allocation7 + $0x4] sm:$0xf]
    %v90 = vld [vmem:[#allocation7 + $0x8] sm:$0xf]
    %v91 = vld [vmem:[#allocation7 + $0xc] sm:$0xf]
    %v92 = vld [vmem:[#allocation7 + $0x10] sm:$0xf]
    %v93 = vld [vmem:[#allocation7 + $0x14] sm:$0xf]
    %v94 = vld [vmem:[#allocation7 + $0x18] sm:$0xf]
    %v95 = vld [vmem:[#allocation7 + $0x1c] sm:$0xf]
    %v96 = vld [vmem:[#allocation7 + $0x20] sm:$0xf]
    %v97 = vld [vmem:[#allocation7 + $0x24] sm:$0xf]
    %v98 = vld [vmem:[#allocation7 + $0x28] sm:$0xf]
    %v99 = vld [vmem:[#allocation7 + $0x2c] sm:$0xf]
    %v100 = vld [vmem:[#allocation7 + $0x30] sm:$0xf]
    %v101 = vld [vmem:[#allocation7 + $0x34] sm:$0xf]
    %v102 = vld [vmem:[#allocation7 + $0x38] sm:$0xf]
    %v103 = vld [vmem:[#allocation7 + $0x3c] sm:$0xf]
    %v104 = vld [vmem:[%s5] sm:$0x1]
    %v105 = vld [vmem:[#allocation8] sm:$0xf]
    %v106 = vld [vmem:[#allocation8 + $0x4] sm:$0xf]
    %v107 = vld [vmem:[#allocation8 + $0x8] sm:$0xf]
    %v108 = vld [vmem:[#allocation8 + $0xc] sm:$0xf]
    %v109 = vld [vmem:[#allocation8 + $0x10] sm:$0xf]
    %v110 = vld [vmem:[#allocation8 + $0x14] sm:$0xf]
    %v111 = vld [vmem:[#allocation8 + $0x18] sm:$0xf]
    %v112 = vld [vmem:[#allocation8 + $0x1c] sm:$0xf]
    %v113 = vld [vmem:[#allocation8 + $0x20] sm:$0xf]
    %v114 = vld [vmem:[#allocation8 + $0x24] sm:$0xf]
    %v115 = vld [vmem:[#allocation8 + $0x28] sm:$0xf]
    %v116 = vld [vmem:[#allocation8 + $0x2c] sm:$0xf]
    %v117 = vld [vmem:[#allocation8 + $0x30] sm:$0xf]
    %v118 = vld [vmem:[#allocation8 + $0x34] sm:$0xf]
    %v119 = vld [vmem:[#allocation8 + $0x38] sm:$0xf]
    %v120 = vld [vmem:[#allocation8 + $0x3c] sm:$0xf]
    %v121 = vld [vmem:[%s7] sm:$0x1]
    %v122 = vld [vmem:[#allocation2] sm:$0xf]
    %v123 = vld [vmem:[#allocation2 + $0x4] sm:$0xf]
    %v124 = vld [vmem:[#allocation2 + $0x8] sm:$0xf]
    %v125 = vld [vmem:[#allocation2 + $0xc] sm:$0xf]
    %v126 = vunpack.c.l.bf16 %v122
    %v127 = vunpack.c.l.bf16 %v123
    %v128 = vunpack.c.l.bf16 %v124
    %v129 = vunpack.c.l.bf16 %v125
    %v134 = vcombine.high %v126, %v126
    %v135 = vcombine.high %v127, %v127
    %v136 = vcombine.high %v128, %v128
    %v137 = vcombine.high %v129, %v129
    %vm142 = vcmask 1043456
    %v143 = vsel %vm142, %v126, 0.0
    %v144 = vsel %vm142, %v134, 0.0
    %v145 = vadd.f32 %v143, %v144
    %146 = vadd.xlane.f32.xlu0 %v145
    %v147 = vpop.xlane.xlu0 %146
    %v148 = vsel %vm142, %v127, 0.0
    %v149 = vsel %vm142, %v135, 0.0
    %v150 = vadd.f32 %v148, %v149
    %151 = vadd.xlane.f32.xlu0 %v150
    %v152 = vpop.xlane.xlu0 %151
    %v153 = vsel %vm142, %v128, 0.0
    %v154 = vsel %vm142, %v136, 0.0
    %v155 = vadd.f32 %v153, %v154
    %156 = vadd.xlane.f32.xlu0 %v155
    %v157 = vpop.xlane.xlu0 %156
    %v158 = vsel %vm142, %v129, 0.0
    %v159 = vsel %vm142, %v137, 0.0
    %v160 = vadd.f32 %v158, %v159
    %161 = vadd.xlane.f32.xlu0 %v160
    %v162 = vpop.xlane.xlu0 %161
    %v163 = vmul.f32 %v147, 0.00390625
    %v164 = vmul.f32 %v152, 0.00390625
    %v165 = vmul.f32 %v157, 0.00390625
    %v166 = vmul.f32 %v162, 0.00390625
    %v168 = vlaneseq
    %v169 = vshrl.u32 %v168, 7
    %v170 = vsub.s32 0, %v169
    %v171 = vrot.slane %v87, %v170
    %v177 = vlaneseq
    %v178 = vand.u32 %v177, 127
    %v179 = vlaneseq
    %v180 = vshrl.u32 %v179, 7
    %v181 = vsub.s32 %v178, %v180
    %v182 = vrot.slane %v163, %v181
    %v183 = vlaneseq
    %v184 = vshrl.u32 %v183, 7
    %v185 = vsub.s32 %v178, %v184
    %v186 = vrot.slane %v164, %v185
    %v187 = vlaneseq
    %v188 = vshrl.u32 %v187, 7
    %v189 = vsub.s32 %v178, %v188
    %v190 = vrot.slane %v165, %v189
    %v191 = vlaneseq
    %v192 = vshrl.u32 %v191, 7
    %v193 = vsub.s32 %v178, %v192
    %v194 = vrot.slane %v166, %v193
    %vm195 = vcmask 1041409
    %v196 = vsel %vm195, %v186, %v182
    %vm197 = vcmask 1042434
    %v198 = vsel %vm197, %v190, %v196
    %vm199 = vcmask 1043459
    %v200 = vsel %vm199, %v194, %v198
    %vm201 = vcmask 31744
    %v202 = vsel %vm201, %v200, 0
    %v205 = vsel %vm142, %v86, 0
    %207 = vmatprep.subr.mxu0 0.0
    %208 = vmatpush1.msra.mxu0 %v205
    %209 = vmatprep.subr.mxu0 0.0
    %210 = vmatpush1.msra.mxu0 0.0
    %211 = vmatprep.subr.mxu0 0.0
    %212 = vmatpush1.msra.mxu0 0.0
    %213 = vmatprep.subr.mxu0 0.0
    %214 = vmatpush1.msra.mxu0 0.0
    %215 = vmatprep.subr.mxu0 0.0
    %216 = vmatpush1.msra.mxu0 0.0
    %217 = vmatprep.subr.mxu0 0.0
    %218 = vmatpush1.msra.mxu0 0.0
    %219 = vmatprep.subr.mxu0 0.0
    %220 = vmatpush1.msra.mxu0 0.0
    %221 = vmatprep.subr.mxu0 0.0
    %222 = vmatpush1.msra.mxu0 0.0
    %223 = vmatprep.subr.mxu0 0.0
    %224 = vmatpush1.msra.mxu0 0.0
    %225 = vmatprep.subr.mxu0 0.0
    %226 = vmatpush1.msra.mxu0 0.0
    %227 = vmatprep.subr.mxu0 0.0
    %228 = vmatpush1.msra.mxu0 0.0
    %229 = vmatprep.subr.mxu0 0.0
    %230 = vmatpush1.msra.mxu0 0.0
    %231 = vmatprep.subr.mxu0 0.0
    %232 = vmatpush1.msra.mxu0 0.0
    %233 = vmatprep.subr.mxu0 0.0
    %234 = vmatpush1.msra.mxu0 0.0
    %235 = vmatprep.subr.mxu0 0.0
    %236 = vmatpush1.msra.mxu0 0.0
    %237 = vmatprep.subr.mxu0 0.0
    %238 = vmatpush1.msra.mxu0 0.0
    %239 = vmatprep.subr.mxu0 0.0
    %240 = vmatpush1.msra.mxu0 0.0
    %241 = vmatprep.subr.mxu0 0.0
    %242 = vmatpush1.msra.mxu0 0.0
    %243 = vmatprep.subr.mxu0 0.0
    %244 = vmatpush1.msra.mxu0 0.0
    %245 = vmatprep.subr.mxu0 0.0
    %246 = vmatpush1.msra.mxu0 0.0
    %247 = vmatprep.subr.mxu0 0.0
    %248 = vmatpush1.msra.mxu0 0.0
    %249 = vmatprep.subr.mxu0 0.0
    %250 = vmatpush1.msra.mxu0 0.0
    %251 = vmatprep.subr.mxu0 0.0
    %252 = vmatpush1.msra.mxu0 0.0
    %253 = vmatprep.subr.mxu0 0.0
    %254 = vmatpush1.msra.mxu0 0.0
    %255 = vmatprep.subr.mxu0 0.0
    %256 = vmatpush1.msra.mxu0 0.0
    %257 = vmatprep.subr.mxu0 0.0
    %258 = vmatpush1.msra.mxu0 0.0
    %259 = vmatprep.subr.mxu0 0.0
    %260 = vmatpush1.msra.mxu0 0.0
    %261 = vmatprep.subr.mxu0 0.0
    %262 = vmatpush1.msra.mxu0 0.0
    %263 = vmatprep.subr.mxu0 0.0
    %264 = vmatpush1.msra.mxu0 0.0
    %265 = vmatprep.subr.mxu0 0.0
    %266 = vmatpush1.msra.mxu0 0.0
    %267 = vmatprep.subr.mxu0 0.0
    %268 = vmatpush1.msra.mxu0 0.0
    %269 = vmatprep.subr.mxu0 0.0
    %270 = vmatpush1.msra.mxu0 0.0
    %271 = vmatprep.mubr.f32.mxu0 0.0
    %272 = vmatmul.mubr.f32.gmra.mrb[0].mxu0 %v202
    %v273 = vpop.f32.mrb[0].mxu0
    %v274 = vadd.f32 %v171, %v273
    %v275 = vpop.f32.mrb[0].mxu0
    %276 = vdwg.mxu0
    %v277 = vpack.c.bf16 %v274, %v274
    %v279 = vlaneseq
    %v280 = vshrl.u32 %v279, 7
    %v281 = vsub.s32 0, %v280
    %v282 = vrot.slane %v104, %v281
    %v300 = vunpack.c.l.b16 %v88
    %v301 = vunpack.c.l.b16 %v89
    %v302 = vunpack.c.l.b16 %v90
    %v303 = vunpack.c.l.b16 %v91
    %v304 = vunpack.c.l.b16 %v92
    %v305 = vunpack.c.l.b16 %v93
    %v306 = vunpack.c.l.b16 %v94
    %v307 = vunpack.c.l.b16 %v95
    %v308 = vunpack.c.l.b16 %v96
    %v309 = vunpack.c.l.b16 %v97
    %v310 = vunpack.c.l.b16 %v98
    %v311 = vunpack.c.l.b16 %v99
    %v312 = vunpack.c.l.b16 %v100
    %v313 = vunpack.c.l.b16 %v101
    %v314 = vunpack.c.l.b16 %v102
    %v315 = vunpack.c.l.b16 %v103
    %v316 = vpack.c.b16 %v301, %v300
    %v317 = vpack.c.b16 %v303, %v302
    %v318 = vpack.c.b16 %v305, %v304
    %v319 = vpack.c.b16 %v307, %v306
    %v320 = vpack.c.b16 %v309, %v308
    %v321 = vpack.c.b16 %v311, %v310
    %v322 = vpack.c.b16 %v313, %v312
    %v323 = vpack.c.b16 %v315, %v314
    %332 = vmatprep.subr.bf16.mxu0 0
    %333 = vmatpush1.bf16.msra.mxu0 %v316
    %334 = vmatprep.subr.bf16.mxu0 0
    %335 = vmatpush1.bf16.msra.mxu0 %v317
    %336 = vmatprep.subr.bf16.mxu0 0
    %337 = vmatpush1.bf16.msra.mxu0 %v318
    %338 = vmatprep.subr.bf16.mxu0 0
    %339 = vmatpush1.bf16.msra.mxu0 %v319
    %340 = vmatprep.subr.bf16.mxu0 0
    %341 = vmatpush1.bf16.msra.mxu0 %v320
    %342 = vmatprep.subr.bf16.mxu0 0
    %343 = vmatpush1.bf16.msra.mxu0 %v321
    %344 = vmatprep.subr.bf16.mxu0 0
    %345 = vmatpush1.bf16.msra.mxu0 %v322
    %346 = vmatprep.subr.bf16.mxu0 0
    %347 = vmatpush1.bf16.msra.mxu0 %v323
    %348 = vmatprep.subr.bf16.mxu0 0
    %349 = vmatpush1.bf16.msra.mxu0 0
    %350 = vmatprep.subr.bf16.mxu0 0
    %351 = vmatpush1.bf16.msra.mxu0 0
    %352 = vmatprep.subr.bf16.mxu0 0
    %353 = vmatpush1.bf16.msra.mxu0 0
    %354 = vmatprep.subr.bf16.mxu0 0
    %355 = vmatpush1.bf16.msra.mxu0 0
    %356 = vmatprep.subr.bf16.mxu0 0
    %357 = vmatpush1.bf16.msra.mxu0 0
    %358 = vmatprep.subr.bf16.mxu0 0
    %359 = vmatpush1.bf16.msra.mxu0 0
    %360 = vmatprep.subr.bf16.mxu0 0
    %361 = vmatpush1.bf16.msra.mxu0 0
    %362 = vmatprep.subr.bf16.mxu0 0
    %363 = vmatpush1.bf16.msra.mxu0 0
    %364 = vmatprep.mubr.bf16.mxu0 0
    %365 = vmatmul.mubr.bf16.gmra.mrb[0].mxu0 %v277
    %v366 = vpop.f32.mrb[0].mxu0
    %v367 = vadd.f32 %v282, %v366
    %v368 = vpop.f32.mrb[0].mxu0
    %v369 = vpop.f32.mrb[0].mxu0
    %v370 = vpop.f32.mrb[0].mxu0
    %371 = vdwg.mxu0
    %v372 = vmul.f32 %v367, %v367
    %v373 = vmul.f32 %v367, %v372
    %v374 = vmul.f32 %v373, 0.044715
    %v375 = vadd.f32 %v367, %v374
    %v376 = vmul.f32 %v375, 0.7978846
    %v377 = vtanh.pop %v376
    %v378 = vadd.f32 %v377, 1.0
    %v379 = vmul.f32 %v378, 0.5
    %v380 = vmul.f32 %v367, %v379
    %v381 = vpack.c.bf16 %v380, %v380
    %v383 = vlaneseq
    %v384 = vshrl.u32 %v383, 7
    %v385 = vsub.s32 0, %v384
    %v386 = vrot.slane %v121, %v385
    %v404 = vunpack.c.l.b16 %v105
    %v405 = vunpack.c.l.b16 %v106
    %v406 = vunpack.c.l.b16 %v107
    %v407 = vunpack.c.l.b16 %v108
    %v408 = vunpack.c.l.b16 %v109
    %v409 = vunpack.c.l.b16 %v110
    %v410 = vunpack.c.l.b16 %v111
    %v411 = vunpack.c.l.b16 %v112
    %v412 = vunpack.c.l.b16 %v113
    %v413 = vunpack.c.l.b16 %v114
    %v414 = vunpack.c.l.b16 %v115
    %v415 = vunpack.c.l.b16 %v116
    %v416 = vunpack.c.l.b16 %v117
    %v417 = vunpack.c.l.b16 %v118
    %v418 = vunpack.c.l.b16 %v119
    %v419 = vunpack.c.l.b16 %v120
    %v420 = vpack.c.b16 %v405, %v404
    %v421 = vpack.c.b16 %v407, %v406
    %v422 = vpack.c.b16 %v409, %v408
    %v423 = vpack.c.b16 %v411, %v410
    %v424 = vpack.c.b16 %v413, %v412
    %v425 = vpack.c.b16 %v415, %v414
    %v426 = vpack.c.b16 %v417, %v416
    %v427 = vpack.c.b16 %v419, %v418
    %436 = vmatprep.subr.bf16.mxu0 0
    %437 = vmatpush1.bf16.msra.mxu0 %v420
    %438 = vmatprep.subr.bf16.mxu0 0
    %439 = vmatpush1.bf16.msra.mxu0 %v421
    %440 = vmatprep.subr.bf16.mxu0 0
    %441 = vmatpush1.bf16.msra.mxu0 %v422
    %442 = vmatprep.subr.bf16.mxu0 0
    %443 = vmatpush1.bf16.msra.mxu0 %v423
    %444 = vmatprep.subr.bf16.mxu0 0
    %445 = vmatpush1.bf16.msra.mxu0 %v424
    %446 = vmatprep.subr.bf16.mxu0 0
    %447 = vmatpush1.bf16.msra.mxu0 %v425
    %448 = vmatprep.subr.bf16.mxu0 0
    %449 = vmatpush1.bf16.msra.mxu0 %v426
    %450 = vmatprep.subr.bf16.mxu0 0
    %451 = vmatpush1.bf16.msra.mxu0 %v427
    %452 = vmatprep.subr.bf16.mxu0 0
    %453 = vmatpush1.bf16.msra.mxu0 0
    %454 = vmatprep.subr.bf16.mxu0 0
    %455 = vmatpush1.bf16.msra.mxu0 0
    %456 = vmatprep.subr.bf16.mxu0 0
    %457 = vmatpush1.bf16.msra.mxu0 0
    %458 = vmatprep.subr.bf16.mxu0 0
    %459 = vmatpush1.bf16.msra.mxu0 0
    %460 = vmatprep.subr.bf16.mxu0 0
    %461 = vmatpush1.bf16.msra.mxu0 0
    %462 = vmatprep.subr.bf16.mxu0 0
    %463 = vmatpush1.bf16.msra.mxu0 0
    %464 = vmatprep.subr.bf16.mxu0 0
    %465 = vmatpush1.bf16.msra.mxu0 0
    %466 = vmatprep.subr.bf16.mxu0 0
    %467 = vmatpush1.bf16.msra.mxu0 0
    %468 = vmatprep.mubr.bf16.mxu0 0
    %469 = vmatmul.mubr.bf16.gmra.mrb[0].mxu0 %v381
    %v470 = vpop.f32.mrb[0].mxu0
    %v471 = vadd.f32 %v386, %v470
    %v472 = vpop.f32.mrb[0].mxu0
    %v473 = vpop.f32.mrb[0].mxu0
    %v474 = vpop.f32.mrb[0].mxu0
    %475 = vdwg.mxu0
    %476 = vst [vmem:[#allocation10] sm:$0xf] %v471
    %v477 = vld [vmem:[#allocation5] sm:$0x3]
    %v478 = vld [vmem:[#allocation5 + $0x2] sm:$0x3]
    %v479 = vld [vmem:[#allocation5 + $0x4] sm:$0x3]
    %v480 = vld [vmem:[#allocation5 + $0x6] sm:$0x3]
    %v481 = vld [vmem:[#allocation5 + $0x8] sm:$0x3]
    %v482 = vld [vmem:[#allocation5 + $0xa] sm:$0x3]
    %v483 = vld [vmem:[#allocation5 + $0xc] sm:$0x3]
    %v484 = vld [vmem:[#allocation5 + $0xe] sm:$0x3]
    %v485 = vunpack.c.l.bf16 %v477
    %v486 = vunpack.c.l.bf16 %v478
    %v487 = vunpack.c.l.bf16 %v479
    %v488 = vunpack.c.l.bf16 %v480
    %v489 = vunpack.c.l.bf16 %v481
    %v490 = vunpack.c.l.bf16 %v482
    %v491 = vunpack.c.l.bf16 %v483
    %v492 = vunpack.c.l.bf16 %v484
    %vm493 = vcmask 519168
    %v494 = vsel %vm493, %v485, 0.0
    %495 = vadd.xlane.f32.xlu0 %v494
    %v496 = vpop.xlane.xlu0 %495
    %v497 = vsel %vm493, %v486, 0.0
    %498 = vadd.xlane.f32.xlu0 %v497
    %v499 = vpop.xlane.xlu0 %498
    %v500 = vsel %vm493, %v487, 0.0
    %501 = vadd.xlane.f32.xlu0 %v500
    %v502 = vpop.xlane.xlu0 %501
    %v503 = vsel %vm493, %v488, 0.0
    %504 = vadd.xlane.f32.xlu0 %v503
    %v505 = vpop.xlane.xlu0 %504
    %v506 = vsel %vm493, %v489, 0.0
    %507 = vadd.xlane.f32.xlu0 %v506
    %v508 = vpop.xlane.xlu0 %507
    %v509 = vsel %vm493, %v490, 0.0
    %510 = vadd.xlane.f32.xlu0 %v509
    %v511 = vpop.xlane.xlu0 %510
    %v512 = vsel %vm493, %v491, 0.0
    %513 = vadd.xlane.f32.xlu0 %v512
    %v514 = vpop.xlane.xlu0 %513
    %v515 = vsel %vm493, %v492, 0.0
    %516 = vadd.xlane.f32.xlu0 %v515
    %v517 = vpop.xlane.xlu0 %516
    %v518 = vmul.f32 %v496, 0.015625
    %v519 = vmul.f32 %v499, 0.015625
    %v520 = vmul.f32 %v502, 0.015625
    %v521 = vmul.f32 %v505, 0.015625
    %v522 = vmul.f32 %v508, 0.015625
    %v523 = vmul.f32 %v511, 0.015625
    %v524 = vmul.f32 %v514, 0.015625
    %v525 = vmul.f32 %v517, 0.015625
    %v534 = vlaneseq
    %v535 = vshrl.u32 %v534, 7
    %v536 = vsub.s32 %v178, %v535
    %v537 = vrot.slane %v518, %v536
    %v538 = vlaneseq
    %v539 = vshrl.u32 %v538, 7
    %v540 = vsub.s32 %v178, %v539
    %v541 = vrot.slane %v519, %v540
    %v542 = vlaneseq
    %v543 = vshrl.u32 %v542, 7
    %v544 = vsub.s32 %v178, %v543
    %v545 = vrot.slane %v520, %v544
    %v546 = vlaneseq
    %v547 = vshrl.u32 %v546, 7
    %v548 = vsub.s32 %v178, %v547
    %v549 = vrot.slane %v521, %v548
    %v550 = vlaneseq
    %v551 = vshrl.u32 %v550, 7
    %v552 = vsub.s32 %v178, %v551
    %v553 = vrot.slane %v522, %v552
    %v554 = vlaneseq
    %v555 = vshrl.u32 %v554, 7
    %v556 = vsub.s32 %v178, %v555
    %v557 = vrot.slane %v523, %v556
    %v558 = vlaneseq
    %v559 = vshrl.u32 %v558, 7
    %v560 = vsub.s32 %v178, %v559
    %v561 = vrot.slane %v524, %v560
    %v562 = vlaneseq
    %v563 = vshrl.u32 %v562, 7
    %v564 = vsub.s32 %v178, %v563
    %v565 = vrot.slane %v525, %v564
    %v566 = vsel %vm195, %v541, %v537
    %v567 = vsel %vm197, %v545, %v566
    %v568 = vsel %vm199, %v549, %v567
    %vm569 = vcmask 1044484
    %v570 = vsel %vm569, %v553, %v568
    %vm571 = vcmask 1045509
    %v572 = vsel %vm571, %v557, %v570
    %vm573 = vcmask 1046534
    %v574 = vsel %vm573, %v561, %v572
    %vm575 = vcmask 1047559
    %v576 = vsel %vm575, %v565, %v574
    %v577 = vsel %vm201, %v576, 0
    %579 = vmatprep.subr.mxu0 0.0
    %580 = vmatpush1.msra.mxu0 %v205
    %581 = vmatprep.subr.mxu0 0.0
    %582 = vmatpush1.msra.mxu0 0.0
    %583 = vmatprep.subr.mxu0 0.0
    %584 = vmatpush1.msra.mxu0 0.0
    %585 = vmatprep.subr.mxu0 0.0
    %586 = vmatpush1.msra.mxu0 0.0
    %587 = vmatprep.subr.mxu0 0.0
    %588 = vmatpush1.msra.mxu0 0.0
    %589 = vmatprep.subr.mxu0 0.0
    %590 = vmatpush1.msra.mxu0 0.0
    %591 = vmatprep.subr.mxu0 0.0
    %592 = vmatpush1.msra.mxu0 0.0
    %593 = vmatprep.subr.mxu0 0.0
    %594 = vmatpush1.msra.mxu0 0.0
    %595 = vmatprep.subr.mxu0 0.0
    %596 = vmatpush1.msra.mxu0 0.0
    %597 = vmatprep.subr.mxu0 0.0
    %598 = vmatpush1.msra.mxu0 0.0
    %599 = vmatprep.subr.mxu0 0.0
    %600 = vmatpush1.msra.mxu0 0.0
    %601 = vmatprep.subr.mxu0 0.0
    %602 = vmatpush1.msra.mxu0 0.0
    %603 = vmatprep.subr.mxu0 0.0
    %604 = vmatpush1.msra.mxu0 0.0
    %605 = vmatprep.subr.mxu0 0.0
    %606 = vmatpush1.msra.mxu0 0.0
    %607 = vmatprep.subr.mxu0 0.0
    %608 = vmatpush1.msra.mxu0 0.0
    %609 = vmatprep.subr.mxu0 0.0
    %610 = vmatpush1.msra.mxu0 0.0
    %611 = vmatprep.subr.mxu0 0.0
    %612 = vmatpush1.msra.mxu0 0.0
    %613 = vmatprep.subr.mxu0 0.0
    %614 = vmatpush1.msra.mxu0 0.0
    %615 = vmatprep.subr.mxu0 0.0
    %616 = vmatpush1.msra.mxu0 0.0
    %617 = vmatprep.subr.mxu0 0.0
    %618 = vmatpush1.msra.mxu0 0.0
    %619 = vmatprep.subr.mxu0 0.0
    %620 = vmatpush1.msra.mxu0 0.0
    %621 = vmatprep.subr.mxu0 0.0
    %622 = vmatpush1.msra.mxu0 0.0
    %623 = vmatprep.subr.mxu0 0.0
    %624 = vmatpush1.msra.mxu0 0.0
    %625 = vmatprep.subr.mxu0 0.0
    %626 = vmatpush1.msra.mxu0 0.0
    %627 = vmatprep.subr.mxu0 0.0
    %628 = vmatpush1.msra.mxu0 0.0
    %629 = vmatprep.subr.mxu0 0.0
    %630 = vmatpush1.msra.mxu0 0.0
    %631 = vmatprep.subr.mxu0 0.0
    %632 = vmatpush1.msra.mxu0 0.0
    %633 = vmatprep.subr.mxu0 0.0
    %634 = vmatpush1.msra.mxu0 0.0
    %635 = vmatprep.subr.mxu0 0.0
    %636 = vmatpush1.msra.mxu0 0.0
    %637 = vmatprep.subr.mxu0 0.0
    %638 = vmatpush1.msra.mxu0 0.0
    %639 = vmatprep.subr.mxu0 0.0
    %640 = vmatpush1.msra.mxu0 0.0
    %641 = vmatprep.subr.mxu0 0.0
    %642 = vmatpush1.msra.mxu0 0.0
    %643 = vmatprep.mubr.f32.mxu0 0.0
    %644 = vmatmul.mubr.f32.gmra.mrb[0].mxu0 %v577
    %v645 = vpop.f32.mrb[0].mxu0
    %v646 = vadd.f32 %v171, %v645
    %v647 = vpop.f32.mrb[0].mxu0
    %648 = vdwg.mxu0
    %v649 = vpack.c.bf16 %v646, %v646
    %650 = vmatprep.subr.bf16.mxu0 0
    %651 = vmatpush1.bf16.msra.mxu0 %v316
    %652 = vmatprep.subr.bf16.mxu0 0
    %653 = vmatpush1.bf16.msra.mxu0 %v317
    %654 = vmatprep.subr.bf16.mxu0 0
    %655 = vmatpush1.bf16.msra.mxu0 %v318
    %656 = vmatprep.subr.bf16.mxu0 0
    %657 = vmatpush1.bf16.msra.mxu0 %v319
    %658 = vmatprep.subr.bf16.mxu0 0
    %659 = vmatpush1.bf16.msra.mxu0 %v320
    %660 = vmatprep.subr.bf16.mxu0 0
    %661 = vmatpush1.bf16.msra.mxu0 %v321
    %662 = vmatprep.subr.bf16.mxu0 0
    %663 = vmatpush1.bf16.msra.mxu0 %v322
    %664 = vmatprep.subr.bf16.mxu0 0
    %665 = vmatpush1.bf16.msra.mxu0 %v323
    %666 = vmatprep.subr.bf16.mxu0 0
    %667 = vmatpush1.bf16.msra.mxu0 0
    %668 = vmatprep.subr.bf16.mxu0 0
    %669 = vmatpush1.bf16.msra.mxu0 0
    %670 = vmatprep.subr.bf16.mxu0 0
    %671 = vmatpush1.bf16.msra.mxu0 0
    %672 = vmatprep.subr.bf16.mxu0 0
    %673 = vmatpush1.bf16.msra.mxu0 0
    %674 = vmatprep.subr.bf16.mxu0 0
    %675 = vmatpush1.bf16.msra.mxu0 0
    %676 = vmatprep.subr.bf16.mxu0 0
    %677 = vmatpush1.bf16.msra.mxu0 0
    %678 = vmatprep.subr.bf16.mxu0 0
    %679 = vmatpush1.bf16.msra.mxu0 0
    %680 = vmatprep.subr.bf16.mxu0 0
    %681 = vmatpush1.bf16.msra.mxu0 0
    %682 = vmatprep.mubr.bf16.mxu0 0
    %683 = vmatmul.mubr.bf16.gmra.mrb[0].mxu0 %v649
    %v684 = vpop.f32.mrb[0].mxu0
    %v685 = vadd.f32 %v282, %v684
    %v686 = vpop.f32.mrb[0].mxu0
    %v687 = vpop.f32.mrb[0].mxu0
    %v688 = vpop.f32.mrb[0].mxu0
    %689 = vdwg.mxu0
    %v690 = vmul.f32 %v685, %v685
    %v691 = vmul.f32 %v685, %v690
    %v692 = vmul.f32 %v691, 0.044715
    %v693 = vadd.f32 %v685, %v692
    %v694 = vmul.f32 %v693, 0.7978846
    %v695 = vtanh.pop %v694
    %v696 = vadd.f32 %v695, 1.0
    %v697 = vmul.f32 %v696, 0.5
    %v698 = vmul.f32 %v685, %v697
    %v699 = vpack.c.bf16 %v698, %v698
    %700 = vmatprep.subr.bf16.mxu0 0
    %701 = vmatpush1.bf16.msra.mxu0 %v420
    %702 = vmatprep.subr.bf16.mxu0 0
    %703 = vmatpush1.bf16.msra.mxu0 %v421
    %704 = vmatprep.subr.bf16.mxu0 0
    %705 = vmatpush1.bf16.msra.mxu0 %v422
    %706 = vmatprep.subr.bf16.mxu0 0
    %707 = vmatpush1.bf16.msra.mxu0 %v423
    %708 = vmatprep.subr.bf16.mxu0 0
    %709 = vmatpush1.bf16.msra.mxu0 %v424
    %710 = vmatprep.subr.bf16.mxu0 0
    %711 = vmatpush1.bf16.msra.mxu0 %v425
    %712 = vmatprep.subr.bf16.mxu0 0
    %713 = vmatpush1.bf16.msra.mxu0 %v426
    %714 = vmatprep.subr.bf16.mxu0 0
    %715 = vmatpush1.bf16.msra.mxu0 %v427
    %716 = vmatprep.subr.bf16.mxu0 0
    %717 = vmatpush1.bf16.msra.mxu0 0
    %718 = vmatprep.subr.bf16.mxu0 0
    %719 = vmatpush1.bf16.msra.mxu0 0
    %720 = vmatprep.subr.bf16.mxu0 0
    %721 = vmatpush1.bf16.msra.mxu0 0
    %722 = vmatprep.subr.bf16.mxu0 0
    %723 = vmatpush1.bf16.msra.mxu0 0
    %724 = vmatprep.subr.bf16.mxu0 0
    %725 = vmatpush1.bf16.msra.mxu0 0
    %726 = vmatprep.subr.bf16.mxu0 0
    %727 = vmatpush1.bf16.msra.mxu0 0
    %728 = vmatprep.subr.bf16.mxu0 0
    %729 = vmatpush1.bf16.msra.mxu0 0
    %730 = vmatprep.subr.bf16.mxu0 0
    %731 = vmatpush1.bf16.msra.mxu0 0
    %732 = vmatprep.mubr.bf16.mxu0 0
    %733 = vmatmul.mubr.bf16.gmra.mrb[0].mxu0 %v699
    %v734 = vpop.f32.mrb[0].mxu0
    %v735 = vadd.f32 %v386, %v734
    %v736 = vpop.f32.mrb[0].mxu0
    %v737 = vpop.f32.mrb[0].mxu0
    %v738 = vpop.f32.mrb[0].mxu0
    %739 = vdwg.mxu0
    %740 = vst [vmem:[#allocation10 + $0x4] sm:$0xff] %v735
    // Predicated region
    $region50: #{tpu_custom_call.1} parent=1 // pred_check
      _
    $region51: #{tpu_custom_call.1} parent=1 // pred_check_branch
      %742 = sbr.rel (0) target = $region53
    $region52: #{tpu_custom_call.1} parent=1 // pred_region
      %s744 = ssub.s32 256, 256
      %745 = vsyncadd [#allocation4], %s744
      %s746 = sshll.u32 [#allocation10], 4
      %s747 = int_to_ptr.vmem [resolvable:$true] %s746
      %752 = dma.vmem_to_hbm [thread:$0]  %s747, 256, %s8, [#allocation4], 128, 128, 8
    $region53: #{tpu_custom_call.1} parent=1 // pred_fallthru
      _
    // Predicated region
    $region54: #{tpu_custom_call.1} parent=1 // pred_check
      _
    $region55: #{tpu_custom_call.1} parent=1 // pred_check_branch
      %754 = sbr.rel (0) target = $region57
    $region56: #{tpu_custom_call.1} parent=1 // pred_region
      %755 = dma.done [#allocation4], 256
    $region57: #{tpu_custom_call.1} parent=1 // pred_fallthru
      _
    %756 = vsyncpa [#allocation3], 1
    %757 = vsyncpa [#allocation6], 1
    %758 = vsyncpa [#allocation9], 1
    %759 = vsyncpa [#allocation4], 1

</llo_original>
